<compile_context>
chip_gen: v7x
topology: tpu7x:2x2x1
jax: 0.10.0
libtpu: 0.0.40
codegen_flags: <defaults>
</compile_context>

<pallas_src>
import jax
import jax.numpy as jnp
from jax.experimental import pallas as pl
from jax.experimental.pallas import tpu as pltpu

EPS = 1e-5        # nn.LayerNorm default
_LANE = 128       # vreg lane width
_SUBLANE = 8      # f32 sublane count


def _round_up(v, m):
    return (v + m - 1) // m * m


def _padded_layernorm(h, gamma, beta, n_true):
    """LayerNorm over the last axis.

    Lanes >= n_true are assumed to be exactly zero (guaranteed by zero-padded
    weights, biases, gamma, beta). The mean therefore needs no mask; the centered
    sum of squares is corrected by the exact (n_pad - n_true) * mu^2 contribution
    of the padded lanes, keeping the stable centered form with no mask temporaries.
    """
    n_pad = h.shape[-1]
    inv_n = 1.0 / float(n_true)
    mu = jnp.sum(h, axis=-1, keepdims=True) * inv_n
    hc = h - mu
    ss = jnp.sum(hc * hc, axis=-1, keepdims=True)
    if n_pad != n_true:
        ss = ss - float(n_pad - n_true) * (mu * mu)
    var = ss * inv_n                                    # biased, like PyTorch
    return hc * jax.lax.rsqrt(var + EPS) * gamma + beta


def _make_kernel(d_true, h_true):
    def kernel(x_ref, w1_ref, v1_ref, w2_ref, v2_ref, o_ref):
        x = x_ref[...]                                  # (tb, Dp) f32
        v1 = v1_ref[...]                                # (8, Hp) f32: rows b1,g1,be1
        v2 = v2_ref[...]                                # (8, Dp) f32: rows b2,g2,be2
        b1, g1, be1 = v1[0:1, :], v1[1:2, :], v1[2:3, :]
        b2, g2, be2 = v2[0:1, :], v2[1:2, :], v2[2:3, :]

        # Linear(input_dim -> hidden_dim): bf16 MXU operands, f32 accumulate.
        h = jnp.dot(x.astype(jnp.bfloat16), w1_ref[...],
                    preferred_element_type=jnp.float32) + b1
        h = _padded_layernorm(h, g1, be1, h_true)       # LayerNorm(hidden_dim)
        h = jnp.maximum(h, 0.0)                         # ReLU
        # Dropout(0.5) -> identity (eval mode).

        # Linear(hidden_dim -> input_dim)
        y = jnp.dot(h.astype(jnp.bfloat16), w2_ref[...],
                    preferred_element_type=jnp.float32) + b2
        y = _padded_layernorm(y, g2, be2, d_true)       # LayerNorm(input_dim)

        o_ref[...] = (x + y).astype(o_ref.dtype)        # residual add

    return kernel


def prepare_params(params):
    """One-time weight prep: pad to 128 lanes, cast matmul weights to bf16, pack
    per-feature vectors. Call once, not per forward (avoids re-paying the weight
    pad + cast HBM pass every call)."""
    D, H = params["w1"].shape
    Dp, Hp = _round_up(D, _LANE), _round_up(H, _LANE)

    def pad2(a, r, c, dtype=None):
        if dtype is not None:
            a = a.astype(dtype)
        return jnp.pad(a, ((0, r - a.shape[0]), (0, c - a.shape[1])))

    def pack_vec(b, g, be, n, n_pad):
        v = jnp.zeros((_SUBLANE, n_pad), jnp.float32)
        v = v.at[0, :n].set(b.reshape(-1))
        v = v.at[1, :n].set(g.reshape(-1))
        v = v.at[2, :n].set(be.reshape(-1))
        return v

    return {
        "d": D, "h": H, "dp": Dp, "hp": Hp,
        "w1p": pad2(params["w1"], Dp, Hp, jnp.bfloat16),   # zero-padded lanes -> h pad = 0
        "w2p": pad2(params["w2"], Hp, Dp, jnp.bfloat16),
        "v1p": pack_vec(params["b1"], params["g1"], params["be1"], H, Hp),
        "v2p": pack_vec(params["b2"], params["g2"], params["be2"], D, Dp),
    }


def residual_block(x, prep, *, tb=None):
    """x: [B, D] float32. prep: output of prepare_params()."""
    B, D = x.shape
    assert D == prep["d"]
    Dp, Hp = prep["dp"], prep["hp"]
    w1p, w2p, v1p, v2p = prep["w1p"], prep["w2p"], prep["v1p"], prep["v2p"]

    if tb is None:
        if B <= 64:
            # Tiny batch: per-grid-step overhead (~0.35us) dominates -> one step.
            tb = _round_up(B, _SUBLANE)
        else:
            # >=4 grid steps -> >=2 per TensorCore on v7x (prefetch/compute overlap
            # and load balance), capped at an MXU-friendly 256-row tile.
            tb = min(256, _round_up(max(B // 4, _SUBLANE), _SUBLANE))
    tb = max(_SUBLANE, min(_round_up(tb, _SUBLANE), 512))
    Bp = _round_up(B, tb)
    grid = (Bp // tb,)

    # Pad the activation only when actually misaligned.
    # TODO(synk): keep activations persistently padded across layers to avoid this
    #             extra HBM pass when D % 128 != 0.
    if (Bp, Dp) != (B, D):
        xp = jnp.pad(x, ((0, Bp - B), (0, Dp - D)))
    else:
        xp = x

    weight_bytes = w1p.size * 2 + w2p.size * 2             # bf16
    vec_bytes = (v1p.size + v2p.size) * 4
    io_bytes = 2 * 2 * tb * Dp * 4                          # x + out tiles, double-buffered
    interm_bytes = 3 * tb * Hp * 4 + 2 * tb * Dp * 4        # live f32 temporaries

    try:
        vmem_cap = pltpu.get_tpu_info().vmem_capacity_bytes
    except Exception:
        vmem_cap = 64 << 20                                 # v7x-safe fallback
    vmem_budget = int(0.8 * vmem_cap)

    cost = pl.CostEstimate(
        flops=int(4 * Bp * Dp * Hp),                        # two matmuls: 2*B*D*H each
        transcendentals=int(2 * Bp),                        # two rsqrt per row
        bytes_accessed=int(2 * Bp * Dp * 4 + weight_bytes + vec_bytes),
    )

    def run(single_buffer_weights):
        def const_spec(shape):
            if single_buffer_weights:
                # Constant (0,0) index map: never re-fetched after step 0, so a
                # single buffer suffices -> halves resident weight VMEM.
                return pl.BlockSpec(shape, lambda i: (0, 0),
                                    pipeline_mode=pl.Buffered(1))
            return pl.BlockSpec(shape, lambda i: (0, 0))

        wb = 1 if single_buffer_weights else 2
        est = wb * (weight_bytes + vec_bytes) + io_bytes + interm_bytes
        vmem_limit = int(min(max(int(1.25 * est), 16 << 20), vmem_budget))

        return pl.pallas_call(
            _make_kernel(prep["d"], prep["h"]),
            out_shape=jax.ShapeDtypeStruct((Bp, Dp), x.dtype),
            grid_spec=pltpu.PrefetchScalarGridSpec(
                num_scalar_prefetch=0,
                grid=grid,
                in_specs=[
                    pl.BlockSpec((tb, Dp), lambda i: (i, 0)),   # x tile (pipelined)
                    const_spec((Dp, Hp)),                       # w1 (bf16, resident)
                    const_spec((_SUBLANE, Hp)),                 # [b1; g1; be1]
                    const_spec((Hp, Dp)),                       # w2 (bf16, resident)
                    const_spec((_SUBLANE, Dp)),                 # [b2; g2; be2]
                ],
                out_specs=pl.BlockSpec((tb, Dp), lambda i: (i, 0)),
            ),
            compiler_params=pltpu.CompilerParams(
                dimension_semantics=("parallel",),
                vmem_limit_bytes=vmem_limit,
            ),
            cost_estimate=cost,
        )(xp, w1p, v1p, w2p, v2p)

    try:
        out_p = run(single_buffer_weights=True)
    except Exception:
        # Installed jax may reject single-buffered pipeline_mode; retry double-buffered.
        out_p = run(single_buffer_weights=False)

    if (Bp, Dp) != (B, D):
        out_p = out_p[:B, :D]
    return out_p


def init_params(key, input_dim, hidden_dim):
    k1, k2, k3, k4 = jax.random.split(key, 4)
    lim1 = 1.0 / jnp.sqrt(input_dim)
    lim2 = 1.0 / jnp.sqrt(hidden_dim)
    return {
        # stored [in, out] so the kernel does x @ W (PyTorch Linear stores [out, in])
        "w1": jax.random.uniform(k1, (input_dim, hidden_dim), jnp.float32, -lim1, lim1),
        "b1": jax.random.uniform(k2, (1, hidden_dim), jnp.float32, -lim1, lim1),
        "g1": jnp.ones((1, hidden_dim), jnp.float32),
        "be1": jnp.zeros((1, hidden_dim), jnp.float32),
        "w2": jax.random.uniform(k3, (hidden_dim, input_dim), jnp.float32, -lim2, lim2),
        "b2": jax.random.uniform(k4, (1, input_dim), jnp.float32, -lim2, lim2),
        "g2": jnp.ones((1, input_dim), jnp.float32),
        "be2": jnp.zeros((1, input_dim), jnp.float32),
    }


def residual_block_ref(x, p):
    h = x @ p["w1"] + p["b1"]
    mu = h.mean(-1, keepdims=True)
    var = ((h - mu) ** 2).mean(-1, keepdims=True)
    h = (h - mu) / jnp.sqrt(var + EPS) * p["g1"] + p["be1"]
    h = jnp.maximum(h, 0.0)
    y = h @ p["w2"] + p["b2"]
    mu = y.mean(-1, keepdims=True)
    var = ((y - mu) ** 2).mean(-1, keepdims=True)
    y = (y - mu) / jnp.sqrt(var + EPS) * p["g2"] + p["be2"]
    return x + y


if __name__ == "__main__":
    B, D_IN, HID = 16, 32, 64
    key = jax.random.PRNGKey(0)
    kx, kp = jax.random.split(key)
    x = jax.random.normal(kx, (B, D_IN), jnp.float32)
    params = init_params(kp, D_IN, HID)
    prep = prepare_params(params)      # one-time pad + bf16 cast + pack

    out = jax.block_until_ready(residual_block(x, prep))
    ref = residual_block_ref(x, params)

    assert out.shape == (B, D_IN)
    # bf16 MXU operands with f32 accumulation -> widened tolerance vs pure-f32 ref.
    assert jnp.allclose(out, ref, atol=5e-2, rtol=5e-2), float(jnp.max(jnp.abs(out - ref)))
    print("KERNEL_OK")
</pallas_src>

<mosaic_0001>
module attributes {stable_mosaic.version = 11 : i64} {
  func.func @kernel(%arg0: i32, %arg1: memref<16x128xf32, #tpu.memory_space<vmem>>, %arg2: memref<128x128xbf16, #tpu.memory_space<vmem>>, %arg3: memref<8x128xf32, #tpu.memory_space<vmem>>, %arg4: memref<128x128xbf16, #tpu.memory_space<vmem>>, %arg5: memref<8x128xf32, #tpu.memory_space<vmem>>, %arg6: memref<16x128xf32, #tpu.memory_space<vmem>>) attributes {dimension_semantics = [#tpu.dimension_semantics<parallel>], iteration_bounds = array<i64: 1>, scalar_prefetch = 0 : i64, scratch_operands = 0 : i64, tpu.core_type = #tpu.core_type<tc>, window_params = [{transform_indices = @transform_0, window_bounds = array<i64: 16, 128>}, {pipeline_mode = #tpu.pipeline_mode<synchronous>, transform_indices = @transform_1, window_bounds = array<i64: 128, 128>}, {pipeline_mode = #tpu.pipeline_mode<synchronous>, transform_indices = @transform_2, window_bounds = array<i64: 8, 128>}, {pipeline_mode = #tpu.pipeline_mode<synchronous>, transform_indices = @transform_3, window_bounds = array<i64: 128, 128>}, {pipeline_mode = #tpu.pipeline_mode<synchronous>, transform_indices = @transform_4, window_bounds = array<i64: 8, 128>}, {transform_indices = @transform_5, window_bounds = array<i64: 16, 128>}]} {
    %c0 = arith.constant 0 : index
    %c0_0 = arith.constant 0 : index
    %0 = vector.load %arg1[%c0, %c0_0] : memref<16x128xf32, #tpu.memory_space<vmem>>, vector<16x128xf32>
    %c0_1 = arith.constant 0 : index
    %c0_2 = arith.constant 0 : index
    %1 = vector.load %arg3[%c0_1, %c0_2] : memref<8x128xf32, #tpu.memory_space<vmem>>, vector<8x128xf32>
    %c0_3 = arith.constant 0 : index
    %c0_4 = arith.constant 0 : index
    %2 = vector.load %arg5[%c0_3, %c0_4] : memref<8x128xf32, #tpu.memory_space<vmem>>, vector<8x128xf32>
    %3 = vector.extract_strided_slice %1 {offsets = [0, 0], sizes = [1, 128], strides = [1, 1]} : vector<8x128xf32> to vector<1x128xf32>
    %4 = vector.extract_strided_slice %1 {offsets = [1, 0], sizes = [1, 128], strides = [1, 1]} : vector<8x128xf32> to vector<1x128xf32>
    %5 = vector.extract_strided_slice %1 {offsets = [2, 0], sizes = [1, 128], strides = [1, 1]} : vector<8x128xf32> to vector<1x128xf32>
    %6 = vector.extract_strided_slice %2 {offsets = [0, 0], sizes = [1, 128], strides = [1, 1]} : vector<8x128xf32> to vector<1x128xf32>
    %7 = vector.extract_strided_slice %2 {offsets = [1, 0], sizes = [1, 128], strides = [1, 1]} : vector<8x128xf32> to vector<1x128xf32>
    %8 = vector.extract_strided_slice %2 {offsets = [2, 0], sizes = [1, 128], strides = [1, 1]} : vector<8x128xf32> to vector<1x128xf32>
    %9 = arith.truncf %0 : vector<16x128xf32> to vector<16x128xbf16>
    %c0_5 = arith.constant 0 : index
    %c0_6 = arith.constant 0 : index
    %10 = vector.load %arg2[%c0_5, %c0_6] : memref<128x128xbf16, #tpu.memory_space<vmem>>, vector<128x128xbf16>
    %cst = arith.constant dense<0.000000e+00> : vector<16x128xf32>
    %11 = tpu.matmul %9, %10, %cst {dimension_numbers = #tpu.dot_dimension_numbers<[1], [0], [0], [1], [0, 0, 1, 1], [], []>} : vector<16x128xbf16>, vector<128x128xbf16>, vector<16x128xf32> -> vector<16x128xf32>
    %12 = vector.broadcast %3 : vector<1x128xf32> to vector<16x128xf32>
    %13 = arith.addf %11, %12 : vector<16x128xf32>
    %cst_7 = arith.constant dense<0.000000e+00> : vector<16xf32>
    %14 = vector.multi_reduction <add>, %13, %cst_7 [1] : vector<16x128xf32> to vector<16xf32>
    %15 = vector.shape_cast %14 : vector<16xf32> to vector<16x1xf32>
    %cst_8 = arith.constant 1.562500e-02 : f32
    %16 = vector.broadcast %cst_8 : f32 to vector<16x1xf32>
    %17 = arith.mulf %15, %16 : vector<16x1xf32>
    %18 = vector.broadcast %17 : vector<16x1xf32> to vector<16x128xf32>
    %19 = arith.subf %13, %18 : vector<16x128xf32>
    %20 = arith.mulf %19, %19 : vector<16x128xf32>
    %cst_9 = arith.constant dense<0.000000e+00> : vector<16xf32>
    %21 = vector.multi_reduction <add>, %20, %cst_9 [1] : vector<16x128xf32> to vector<16xf32>
    %22 = vector.shape_cast %21 : vector<16xf32> to vector<16x1xf32>
    %23 = arith.mulf %17, %17 : vector<16x1xf32>
    %cst_10 = arith.constant 6.400000e+01 : f32
    %24 = vector.broadcast %cst_10 : f32 to vector<16x1xf32>
    %25 = arith.mulf %24, %23 : vector<16x1xf32>
    %26 = arith.subf %22, %25 : vector<16x1xf32>
    %cst_11 = arith.constant 1.562500e-02 : f32
    %27 = vector.broadcast %cst_11 : f32 to vector<16x1xf32>
    %28 = arith.mulf %26, %27 : vector<16x1xf32>
    %cst_12 = arith.constant 9.99999974E-6 : f32
    %29 = vector.broadcast %cst_12 : f32 to vector<16x1xf32>
    %30 = arith.addf %28, %29 : vector<16x1xf32>
    %31 = math.rsqrt %30 : vector<16x1xf32>
    %32 = vector.broadcast %31 : vector<16x1xf32> to vector<16x128xf32>
    %33 = arith.mulf %19, %32 : vector<16x128xf32>
    %34 = vector.broadcast %4 : vector<1x128xf32> to vector<16x128xf32>
    %35 = arith.mulf %33, %34 : vector<16x128xf32>
    %36 = vector.broadcast %5 : vector<1x128xf32> to vector<16x128xf32>
    %37 = arith.addf %35, %36 : vector<16x128xf32>
    %cst_13 = arith.constant 0.000000e+00 : f32
    %38 = vector.broadcast %cst_13 : f32 to vector<16x128xf32>
    %39 = arith.maximumf %37, %38 : vector<16x128xf32>
    %40 = arith.truncf %39 : vector<16x128xf32> to vector<16x128xbf16>
    %c0_14 = arith.constant 0 : index
    %c0_15 = arith.constant 0 : index
    %41 = vector.load %arg4[%c0_14, %c0_15] : memref<128x128xbf16, #tpu.memory_space<vmem>>, vector<128x128xbf16>
    %cst_16 = arith.constant dense<0.000000e+00> : vector<16x128xf32>
    %42 = tpu.matmul %40, %41, %cst_16 {dimension_numbers = #tpu.dot_dimension_numbers<[1], [0], [0], [1], [0, 0, 1, 1], [], []>} : vector<16x128xbf16>, vector<128x128xbf16>, vector<16x128xf32> -> vector<16x128xf32>
    %43 = vector.broadcast %6 : vector<1x128xf32> to vector<16x128xf32>
    %44 = arith.addf %42, %43 : vector<16x128xf32>
    %cst_17 = arith.constant dense<0.000000e+00> : vector<16xf32>
    %45 = vector.multi_reduction <add>, %44, %cst_17 [1] : vector<16x128xf32> to vector<16xf32>
    %46 = vector.shape_cast %45 : vector<16xf32> to vector<16x1xf32>
    %cst_18 = arith.constant 3.125000e-02 : f32
    %47 = vector.broadcast %cst_18 : f32 to vector<16x1xf32>
    %48 = arith.mulf %46, %47 : vector<16x1xf32>
    %49 = vector.broadcast %48 : vector<16x1xf32> to vector<16x128xf32>
    %50 = arith.subf %44, %49 : vector<16x128xf32>
    %51 = arith.mulf %50, %50 : vector<16x128xf32>
    %cst_19 = arith.constant dense<0.000000e+00> : vector<16xf32>
    %52 = vector.multi_reduction <add>, %51, %cst_19 [1] : vector<16x128xf32> to vector<16xf32>
    %53 = vector.shape_cast %52 : vector<16xf32> to vector<16x1xf32>
    %54 = arith.mulf %48, %48 : vector<16x1xf32>
    %cst_20 = arith.constant 9.600000e+01 : f32
    %55 = vector.broadcast %cst_20 : f32 to vector<16x1xf32>
    %56 = arith.mulf %55, %54 : vector<16x1xf32>
    %57 = arith.subf %53, %56 : vector<16x1xf32>
    %cst_21 = arith.constant 3.125000e-02 : f32
    %58 = vector.broadcast %cst_21 : f32 to vector<16x1xf32>
    %59 = arith.mulf %57, %58 : vector<16x1xf32>
    %cst_22 = arith.constant 9.99999974E-6 : f32
    %60 = vector.broadcast %cst_22 : f32 to vector<16x1xf32>
    %61 = arith.addf %59, %60 : vector<16x1xf32>
    %62 = math.rsqrt %61 : vector<16x1xf32>
    %63 = vector.broadcast %62 : vector<16x1xf32> to vector<16x128xf32>
    %64 = arith.mulf %50, %63 : vector<16x128xf32>
    %65 = vector.broadcast %7 : vector<1x128xf32> to vector<16x128xf32>
    %66 = arith.mulf %64, %65 : vector<16x128xf32>
    %67 = vector.broadcast %8 : vector<1x128xf32> to vector<16x128xf32>
    %68 = arith.addf %66, %67 : vector<16x128xf32>
    %69 = arith.addf %0, %68 : vector<16x128xf32>
    %c0_23 = arith.constant 0 : index
    %c0_24 = arith.constant 0 : index
    %70 = vector.load %arg6[%c0_23, %c0_24] : memref<16x128xf32, #tpu.memory_space<vmem>>, vector<16x128xf32>
    tpu.vector_store %arg6[%c0_23, %c0_24], %69 {strides = array<i32>} : memref<16x128xf32, #tpu.memory_space<vmem>>, vector<16x128xf32>,
    return
  }
  func.func @transform_0(%arg0: i32) -> (i32, i32) {
    %c0_i32 = arith.constant 0 : i32
    %c0_i32_0 = arith.constant 0 : i32
    return %arg0, %c0_i32 : i32, i32
  }
  func.func @transform_1(%arg0: i32) -> (i32, i32) {
    %c0_i32 = arith.constant 0 : i32
    %c0_i32_0 = arith.constant 0 : i32
    %c0_i32_1 = arith.constant 0 : i32
    return %c0_i32, %c0_i32_0 : i32, i32
  }
  func.func @transform_2(%arg0: i32) -> (i32, i32) {
    %c0_i32 = arith.constant 0 : i32
    %c0_i32_0 = arith.constant 0 : i32
    %c0_i32_1 = arith.constant 0 : i32
    return %c0_i32, %c0_i32_0 : i32, i32
  }
  func.func @transform_3(%arg0: i32) -> (i32, i32) {
    %c0_i32 = arith.constant 0 : i32
    %c0_i32_0 = arith.constant 0 : i32
    %c0_i32_1 = arith.constant 0 : i32
    return %c0_i32, %c0_i32_0 : i32, i32
  }
  func.func @transform_4(%arg0: i32) -> (i32, i32) {
    %c0_i32 = arith.constant 0 : i32
    %c0_i32_0 = arith.constant 0 : i32
    %c0_i32_1 = arith.constant 0 : i32
    return %c0_i32, %c0_i32_0 : i32, i32
  }
  func.func @transform_5(%arg0: i32) -> (i32, i32) {
    %c0_i32 = arith.constant 0 : i32
    %c0_i32_0 = arith.constant 0 : i32
    return %arg0, %c0_i32 : i32, i32
  }
}

module attributes {stable_mosaic.version = 11 : i64} {
  func.func @kernel(%arg0: i32, %arg1: memref<16x128xf32, #tpu.memory_space<vmem>>, %arg2: memref<128x128xbf16, #tpu.memory_space<vmem>>, %arg3: memref<8x128xf32, #tpu.memory_space<vmem>>, %arg4: memref<128x128xbf16, #tpu.memory_space<vmem>>, %arg5: memref<8x128xf32, #tpu.memory_space<vmem>>, %arg6: memref<16x128xf32, #tpu.memory_space<vmem>>) attributes {dimension_semantics = [#tpu.dimension_semantics<parallel>], iteration_bounds = array<i64: 1>, scalar_prefetch = 0 : i64, scratch_operands = 0 : i64, tpu.core_type = #tpu.core_type<tc>, window_params = [{transform_indices = @transform_0, window_bounds = array<i64: 16, 128>}, {pipeline_mode = #tpu.pipeline_mode<synchronous>, transform_indices = @transform_1, window_bounds = array<i64: 128, 128>}, {pipeline_mode = #tpu.pipeline_mode<synchronous>, transform_indices = @transform_2, window_bounds = array<i64: 8, 128>}, {pipeline_mode = #tpu.pipeline_mode<synchronous>, transform_indices = @transform_3, window_bounds = array<i64: 128, 128>}, {pipeline_mode = #tpu.pipeline_mode<synchronous>, transform_indices = @transform_4, window_bounds = array<i64: 8, 128>}, {transform_indices = @transform_5, window_bounds = array<i64: 16, 128>}]} {
    %c0 = arith.constant 0 : index
    %c0_0 = arith.constant 0 : index
    %0 = vector.load %arg1[%c0, %c0_0] : memref<16x128xf32, #tpu.memory_space<vmem>>, vector<16x128xf32>
    %c0_1 = arith.constant 0 : index
    %c0_2 = arith.constant 0 : index
    %1 = vector.load %arg3[%c0_1, %c0_2] : memref<8x128xf32, #tpu.memory_space<vmem>>, vector<8x128xf32>
    %c0_3 = arith.constant 0 : index
    %c0_4 = arith.constant 0 : index
    %2 = vector.load %arg5[%c0_3, %c0_4] : memref<8x128xf32, #tpu.memory_space<vmem>>, vector<8x128xf32>
    %3 = vector.extract_strided_slice %1 {offsets = [0, 0], sizes = [1, 128], strides = [1, 1]} : vector<8x128xf32> to vector<1x128xf32>
    %4 = vector.extract_strided_slice %1 {offsets = [1, 0], sizes = [1, 128], strides = [1, 1]} : vector<8x128xf32> to vector<1x128xf32>
    %5 = vector.extract_strided_slice %1 {offsets = [2, 0], sizes = [1, 128], strides = [1, 1]} : vector<8x128xf32> to vector<1x128xf32>
    %6 = vector.extract_strided_slice %2 {offsets = [0, 0], sizes = [1, 128], strides = [1, 1]} : vector<8x128xf32> to vector<1x128xf32>
    %7 = vector.extract_strided_slice %2 {offsets = [1, 0], sizes = [1, 128], strides = [1, 1]} : vector<8x128xf32> to vector<1x128xf32>
    %8 = vector.extract_strided_slice %2 {offsets = [2, 0], sizes = [1, 128], strides = [1, 1]} : vector<8x128xf32> to vector<1x128xf32>
    %9 = arith.truncf %0 : vector<16x128xf32> to vector<16x128xbf16>
    %c0_5 = arith.constant 0 : index
    %c0_6 = arith.constant 0 : index
    %10 = vector.load %arg2[%c0_5, %c0_6] : memref<128x128xbf16, #tpu.memory_space<vmem>>, vector<128x128xbf16>
    %cst = arith.constant dense<0.000000e+00> : vector<16x128xf32>
    %11 = tpu.matmul %9, %10, %cst {dimension_numbers = #tpu.dot_dimension_numbers<[1], [0], [0], [1], [0, 0, 1, 1], [], []>} : vector<16x128xbf16>, vector<128x128xbf16>, vector<16x128xf32> -> vector<16x128xf32>
    %12 = vector.broadcast %3 : vector<1x128xf32> to vector<16x128xf32>
    %13 = arith.addf %11, %12 : vector<16x128xf32>
    %cst_7 = arith.constant dense<0.000000e+00> : vector<16xf32>
    %14 = vector.multi_reduction <add>, %13, %cst_7 [1] : vector<16x128xf32> to vector<16xf32>
    %15 = vector.shape_cast %14 : vector<16xf32> to vector<16x1xf32>
    %cst_8 = arith.constant 1.562500e-02 : f32
    %16 = vector.broadcast %cst_8 : f32 to vector<16x1xf32>
    %17 = arith.mulf %15, %16 : vector<16x1xf32>
    %18 = vector.broadcast %17 : vector<16x1xf32> to vector<16x128xf32>
    %19 = arith.subf %13, %18 : vector<16x128xf32>
    %20 = arith.mulf %19, %19 : vector<16x128xf32>
    %cst_9 = arith.constant dense<0.000000e+00> : vector<16xf32>
    %21 = vector.multi_reduction <add>, %20, %cst_9 [1] : vector<16x128xf32> to vector<16xf32>
    %22 = vector.shape_cast %21 : vector<16xf32> to vector<16x1xf32>
    %23 = arith.mulf %17, %17 : vector<16x1xf32>
    %cst_10 = arith.constant 6.400000e+01 : f32
    %24 = vector.broadcast %cst_10 : f32 to vector<16x1xf32>
    %25 = arith.mulf %24, %23 : vector<16x1xf32>
    %26 = arith.subf %22, %25 : vector<16x1xf32>
    %cst_11 = arith.constant 1.562500e-02 : f32
    %27 = vector.broadcast %cst_11 : f32 to vector<16x1xf32>
    %28 = arith.mulf %26, %27 : vector<16x1xf32>
    %cst_12 = arith.constant 9.99999974E-6 : f32
    %29 = vector.broadcast %cst_12 : f32 to vector<16x1xf32>
    %30 = arith.addf %28, %29 : vector<16x1xf32>
    %31 = math.rsqrt %30 : vector<16x1xf32>
    %32 = vector.broadcast %31 : vector<16x1xf32> to vector<16x128xf32>
    %33 = arith.mulf %19, %32 : vector<16x128xf32>
    %34 = vector.broadcast %4 : vector<1x128xf32> to vector<16x128xf32>
    %35 = arith.mulf %33, %34 : vector<16x128xf32>
    %36 = vector.broadcast %5 : vector<1x128xf32> to vector<16x128xf32>
    %37 = arith.addf %35, %36 : vector<16x128xf32>
    %cst_13 = arith.constant 0.000000e+00 : f32
    %38 = vector.broadcast %cst_13 : f32 to vector<16x128xf32>
    %39 = arith.maximumf %37, %38 : vector<16x128xf32>
    %40 = arith.truncf %39 : vector<16x128xf32> to vector<16x128xbf16>
    %c0_14 = arith.constant 0 : index
    %c0_15 = arith.constant 0 : index
    %41 = vector.load %arg4[%c0_14, %c0_15] : memref<128x128xbf16, #tpu.memory_space<vmem>>, vector<128x128xbf16>
    %cst_16 = arith.constant dense<0.000000e+00> : vector<16x128xf32>
    %42 = tpu.matmul %40, %41, %cst_16 {dimension_numbers = #tpu.dot_dimension_numbers<[1], [0], [0], [1], [0, 0, 1, 1], [], []>} : vector<16x128xbf16>, vector<128x128xbf16>, vector<16x128xf32> -> vector<16x128xf32>
    %43 = vector.broadcast %6 : vector<1x128xf32> to vector<16x128xf32>
    %44 = arith.addf %42, %43 : vector<16x128xf32>
    %cst_17 = arith.constant dense<0.000000e+00> : vector<16xf32>
    %45 = vector.multi_reduction <add>, %44, %cst_17 [1] : vector<16x128xf32> to vector<16xf32>
    %46 = vector.shape_cast %45 : vector<16xf32> to vector<16x1xf32>
    %cst_18 = arith.constant 3.125000e-02 : f32
    %47 = vector.broadcast %cst_18 : f32 to vector<16x1xf32>
    %48 = arith.mulf %46, %47 : vector<16x1xf32>
    %49 = vector.broadcast %48 : vector<16x1xf32> to vector<16x128xf32>
    %50 = arith.subf %44, %49 : vector<16x128xf32>
    %51 = arith.mulf %50, %50 : vector<16x128xf32>
    %cst_19 = arith.constant dense<0.000000e+00> : vector<16xf32>
    %52 = vector.multi_reduction <add>, %51, %cst_19 [1] : vector<16x128xf32> to vector<16xf32>
    %53 = vector.shape_cast %52 : vector<16xf32> to vector<16x1xf32>
    %54 = arith.mulf %48, %48 : vector<16x1xf32>
    %cst_20 = arith.constant 9.600000e+01 : f32
    %55 = vector.broadcast %cst_20 : f32 to vector<16x1xf32>
    %56 = arith.mulf %55, %54 : vector<16x1xf32>
    %57 = arith.subf %53, %56 : vector<16x1xf32>
    %cst_21 = arith.constant 3.125000e-02 : f32
    %58 = vector.broadcast %cst_21 : f32 to vector<16x1xf32>
    %59 = arith.mulf %57, %58 : vector<16x1xf32>
    %cst_22 = arith.constant 9.99999974E-6 : f32
    %60 = vector.broadcast %cst_22 : f32 to vector<16x1xf32>
    %61 = arith.addf %59, %60 : vector<16x1xf32>
    %62 = math.rsqrt %61 : vector<16x1xf32>
    %63 = vector.broadcast %62 : vector<16x1xf32> to vector<16x128xf32>
    %64 = arith.mulf %50, %63 : vector<16x128xf32>
    %65 = vector.broadcast %7 : vector<1x128xf32> to vector<16x128xf32>
    %66 = arith.mulf %64, %65 : vector<16x128xf32>
    %67 = vector.broadcast %8 : vector<1x128xf32> to vector<16x128xf32>
    %68 = arith.addf %66, %67 : vector<16x128xf32>
    %69 = arith.addf %0, %68 : vector<16x128xf32>
    %c0_23 = arith.constant 0 : index
    %c0_24 = arith.constant 0 : index
    %70 = vector.load %arg6[%c0_23, %c0_24] : memref<16x128xf32, #tpu.memory_space<vmem>>, vector<16x128xf32>
    tpu.vector_store %arg6[%c0_23, %c0_24], %69 {strides = array<i32>} : memref<16x128xf32, #tpu.memory_space<vmem>>, vector<16x128xf32>,
    return
  }
  func.func @transform_0(%arg0: i32) -> (i32, i32) {
    %c0_i32 = arith.constant 0 : i32
    %c0_i32_0 = arith.constant 0 : i32
    return %arg0, %c0_i32 : i32, i32
  }
  func.func @transform_1(%arg0: i32) -> (i32, i32) {
    %c0_i32 = arith.constant 0 : i32
    %c0_i32_0 = arith.constant 0 : i32
    %c0_i32_1 = arith.constant 0 : i32
    return %c0_i32, %c0_i32_0 : i32, i32
  }
  func.func @transform_2(%arg0: i32) -> (i32, i32) {
    %c0_i32 = arith.constant 0 : i32
    %c0_i32_0 = arith.constant 0 : i32
    %c0_i32_1 = arith.constant 0 : i32
    return %c0_i32, %c0_i32_0 : i32, i32
  }
  func.func @transform_3(%arg0: i32) -> (i32, i32) {
    %c0_i32 = arith.constant 0 : i32
    %c0_i32_0 = arith.constant 0 : i32
    %c0_i32_1 = arith.constant 0 : i32
    return %c0_i32, %c0_i32_0 : i32, i32
  }
  func.func @transform_4(%arg0: i32) -> (i32, i32) {
    %c0_i32 = arith.constant 0 : i32
    %c0_i32_0 = arith.constant 0 : i32
    %c0_i32_1 = arith.constant 0 : i32
    return %c0_i32, %c0_i32_0 : i32, i32
  }
  func.func @transform_5(%arg0: i32) -> (i32, i32) {
    %c0_i32 = arith.constant 0 : i32
    %c0_i32_0 = arith.constant 0 : i32
    return %arg0, %c0_i32 : i32, i32
  }
}

</mosaic_0001>

<llo_original>
// kernel: tpu_custom_call.1
$region0: #{tpu_custom_call.1}
  #allocation0 [shape = 'u32[]', space=smem, size = 0x4, offset = 0x4, fixed_abs, tag = 'smem constant byte address 0x4 - core index']
  #allocation1 [shape = 'u32[144,128]{1,0:T(1,128)}', space=vmem, size = 0x12000, scoped, tag = 'internal scratch']
  %s0 = inlined_call_operand.hbm [shape: f32[16,128], index: 0, kind: input, shape index: {}]
  %s1 = inlined_call_operand.hbm [shape: bf16[128,128], index: 1, kind: input, shape index: {}]
  %s2 = inlined_call_operand.hbm [shape: f32[8,128], index: 2, kind: input, shape index: {}]
  %s3 = inlined_call_operand.hbm [shape: bf16[128,128], index: 3, kind: input, shape index: {}]
  %s4 = inlined_call_operand.vmem [shape: f32[8,128], index: 4, kind: input, shape index: {}]
  %s5 = inlined_call_operand.hbm [shape: f32[16,128], index: 5, kind: output, shape index: {}]
  %s6 = sld [smem:[#allocation0]]
  $region46: #{tpu_custom_call.1} parent=0
    _
  %s8 = ssub.s32 1, %s6
  %s9 = scalar_select 0, %s8, %s6
  $region1: #{tpu_custom_call.1} parent=0
    #allocation2 [shape = 'u8[8192]{0}', space=vmem, size = 0x2000, scoped, tag = 'input window, operand 0, single buffered']
    #allocation3 [shape = 's32[1]{0}', space=sflag, size = 0x4, scoped, tag = 'scoped memory for tpu_custom_call.1']
    #allocation4 [shape = 's32[1]{0}', space=sflag, size = 0x4, scoped, tag = 'scoped memory for tpu_custom_call.1']
    #allocation5 [shape = 'u8[32768]{0}', space=vmem, size = 0x8000, scoped, tag = 'input window, operand 1, single buffered']
    #allocation6 [shape = 's32[1]{0}', space=sflag, size = 0x4, scoped, tag = 'scoped memory for tpu_custom_call.1']
    #allocation7 [shape = 'u8[4096]{0}', space=vmem, size = 0x1000, scoped, tag = 'input window, operand 2, single buffered']
    #allocation8 [shape = 'u8[32768]{0}', space=vmem, size = 0x8000, scoped, tag = 'input window, operand 3, single buffered']
    #allocation9 [shape = 's32[1]{0}', space=sflag, size = 0x4, scoped, tag = 'scoped memory for tpu_custom_call.1']
    #allocation10 [shape = 'u8[8192]{0}', space=vmem, size = 0x2000, scoped, tag = 'output window, operand 0, single buffered']
    %10 = vsyncpa [#allocation3], 0
    %11 = vsyncpa [#allocation6], 0
    %12 = vsyncpa [#allocation9], 0
    %13 = vsyncpa [#allocation4], 0
    // Predicated region
    $region2: #{tpu_custom_call.1} parent=1 // pred_check
      _
    $region3: #{tpu_custom_call.1} parent=1 // pred_check_branch
      %15 = sbr.rel (0) target = $region5
    $region4: #{tpu_custom_call.1} parent=1 // pred_region
      %s17 = ssub.s32 256, 256
      %18 = vsyncadd [#allocation3], %s17
      %s19 = sshll.u32 [#allocation2], 4
      %s20 = int_to_ptr.vmem [resolvable:$true] %s19
      %25 = dma.hbm_to_vmem [thread:$0]  %s0, 256, %s20, [#allocation3], 128, 128, 8
    $region5: #{tpu_custom_call.1} parent=1 // pred_fallthru
      _
    // Predicated region
    $region6: #{tpu_custom_call.1} parent=1 // pred_check
      _
    $region7: #{tpu_custom_call.1} parent=1 // pred_check_branch
      %27 = sbr.rel (0) target = $region9
    $region8: #{tpu_custom_call.1} parent=1 // pred_region
      %s29 = ssub.s32 1024, 1024
      %30 = vsyncadd [#allocation6], %s29
      %s31 = sshll.u32 [#allocation5], 4
      %s32 = int_to_ptr.vmem [resolvable:$true] %s31
      %37 = dma.hbm_to_vmem [thread:$0]  %s1, 1024, %s32, [#allocation6], 64, 64, 4
    $region9: #{tpu_custom_call.1} parent=1 // pred_fallthru
      _
    // Predicated region
    $region10: #{tpu_custom_call.1} parent=1 // pred_check
      _
    $region11: #{tpu_custom_call.1} parent=1 // pred_check_branch
      %39 = sbr.rel (0) target = $region13
    $region12: #{tpu_custom_call.1} parent=1 // pred_region
      %s41 = ssub.s32 128, 128
      %42 = vsyncadd [#allocation6], %s41
      %s44 = sshll.u32 [#allocation7], 4
      %s45 = int_to_ptr.vmem [resolvable:$true] %s44
      %47 = dma.hbm_to_vmem [thread:$0]  %s2, 128, %s45, [#allocation6]
    $region13: #{tpu_custom_call.1} parent=1 // pred_fallthru
      _
    // Predicated region
    $region14: #{tpu_custom_call.1} parent=1 // pred_check
      _
    $region15: #{tpu_custom_call.1} parent=1 // pred_check_branch
      %49 = sbr.rel (0) target = $region17
    $region16: #{tpu_custom_call.1} parent=1 // pred_region
      %s51 = ssub.s32 1024, 1024
      %52 = vsyncadd [#allocation9], %s51
      %s53 = sshll.u32 [#allocation8], 4
      %s54 = int_to_ptr.vmem [resolvable:$true] %s53
      %59 = dma.hbm_to_vmem [thread:$0]  %s3, 1024, %s54, [#allocation9], 64, 64, 4
    $region17: #{tpu_custom_call.1} parent=1 // pred_fallthru
      _
    // Predicated region
    $region18: #{tpu_custom_call.1} parent=1 // pred_check
      _
    $region19: #{tpu_custom_call.1} parent=1 // pred_check_branch
      %61 = sbr.rel (0) target = $region21
    $region20: #{tpu_custom_call.1} parent=1 // pred_region
      _
    $region21: #{tpu_custom_call.1} parent=1 // pred_fallthru
      _
    // Predicated region
    $region22: #{tpu_custom_call.1} parent=1 // pred_check
      _
    $region23: #{tpu_custom_call.1} parent=1 // pred_check_branch
      %63 = sbr.rel (0) target = $region25
    $region24: #{tpu_custom_call.1} parent=1 // pred_region
      %64 = dma.done [#allocation3], 256
    $region25: #{tpu_custom_call.1} parent=1 // pred_fallthru
      _
    // Predicated region
    $region26: #{tpu_custom_call.1} parent=1 // pred_check
      _
    $region27: #{tpu_custom_call.1} parent=1 // pred_check_branch
      %66 = sbr.rel (0) target = $region29
    $region28: #{tpu_custom_call.1} parent=1 // pred_region
      %67 = dma.done [#allocation6], 1024
    $region29: #{tpu_custom_call.1} parent=1 // pred_fallthru
      _
    // Predicated region
    $region30: #{tpu_custom_call.1} parent=1 // pred_check
      _
    $region31: #{tpu_custom_call.1} parent=1 // pred_check_branch
      %69 = sbr.rel (0) target = $region33
    $region32: #{tpu_custom_call.1} parent=1 // pred_region
      %70 = dma.done [#allocation6], 128
    $region33: #{tpu_custom_call.1} parent=1 // pred_fallthru
      _
    // Predicated region
    $region34: #{tpu_custom_call.1} parent=1 // pred_check
      _
    $region35: #{tpu_custom_call.1} parent=1 // pred_check_branch
      %72 = sbr.rel (0) target = $region37
    $region36: #{tpu_custom_call.1} parent=1 // pred_region
      %73 = dma.done [#allocation9], 1024
    $region37: #{tpu_custom_call.1} parent=1 // pred_fallthru
      _
    %v75 = vld [vmem:[#allocation2] sm:$0xff]
    %v76 = vld [vmem:[#allocation2 + $0x8] sm:$0xff]
    %v77 = vld [vmem:[#allocation7] sm:$0xff]
    %v78 = vld [vmem:[%s4] sm:$0xff]
    %v79 = vpack.c.bf16 %v76, %v75
    %v80 = vld [vmem:[#allocation5] sm:$0xf]
    %v81 = vld [vmem:[#allocation5 + $0x4] sm:$0xf]
    %v82 = vld [vmem:[#allocation5 + $0x8] sm:$0xf]
    %v83 = vld [vmem:[#allocation5 + $0xc] sm:$0xf]
    %v84 = vld [vmem:[#allocation5 + $0x10] sm:$0xf]
    %v85 = vld [vmem:[#allocation5 + $0x14] sm:$0xf]
    %v86 = vld [vmem:[#allocation5 + $0x18] sm:$0xf]
    %v87 = vld [vmem:[#allocation5 + $0x1c] sm:$0xf]
    %v88 = vld [vmem:[#allocation5 + $0x20] sm:$0xf]
    %v89 = vld [vmem:[#allocation5 + $0x24] sm:$0xf]
    %v90 = vld [vmem:[#allocation5 + $0x28] sm:$0xf]
    %v91 = vld [vmem:[#allocation5 + $0x2c] sm:$0xf]
    %v92 = vld [vmem:[#allocation5 + $0x30] sm:$0xf]
    %v93 = vld [vmem:[#allocation5 + $0x34] sm:$0xf]
    %v94 = vld [vmem:[#allocation5 + $0x38] sm:$0xf]
    %v95 = vld [vmem:[#allocation5 + $0x3c] sm:$0xf]
    %v96 = vlaneseq
    %v97 = vshrl.u32 %v96, 7
    %v98 = vsub.s32 0, %v97
    %v99 = vrot.slane %v77, %v98
    %v116 = vunpack.c.l.b16 %v80
    %v117 = vunpack.c.l.b16 %v81
    %v118 = vunpack.c.l.b16 %v82
    %v119 = vunpack.c.l.b16 %v83
    %v120 = vunpack.c.l.b16 %v84
    %v121 = vunpack.c.l.b16 %v85
    %v122 = vunpack.c.l.b16 %v86
    %v123 = vunpack.c.l.b16 %v87
    %v124 = vunpack.c.l.b16 %v88
    %v125 = vunpack.c.l.b16 %v89
    %v126 = vunpack.c.l.b16 %v90
    %v127 = vunpack.c.l.b16 %v91
    %v128 = vunpack.c.l.b16 %v92
    %v129 = vunpack.c.l.b16 %v93
    %v130 = vunpack.c.l.b16 %v94
    %v131 = vunpack.c.l.b16 %v95
    %v132 = vpack.c.b16 %v117, %v116
    %v133 = vpack.c.b16 %v119, %v118
    %v134 = vpack.c.b16 %v121, %v120
    %v135 = vpack.c.b16 %v123, %v122
    %v136 = vpack.c.b16 %v125, %v124
    %v137 = vpack.c.b16 %v127, %v126
    %v138 = vpack.c.b16 %v129, %v128
    %v139 = vpack.c.b16 %v131, %v130
    %148 = vmatprep.subr.bf16.mxu0 0
    %149 = vmatpush1.bf16.msra.mxu0 %v132
    %150 = vmatprep.subr.bf16.mxu0 0
    %151 = vmatpush1.bf16.msra.mxu0 %v133
    %152 = vmatprep.subr.bf16.mxu0 0
    %153 = vmatpush1.bf16.msra.mxu0 %v134
    %154 = vmatprep.subr.bf16.mxu0 0
    %155 = vmatpush1.bf16.msra.mxu0 %v135
    %156 = vmatprep.subr.bf16.mxu0 0
    %157 = vmatpush1.bf16.msra.mxu0 %v136
    %158 = vmatprep.subr.bf16.mxu0 0
    %159 = vmatpush1.bf16.msra.mxu0 %v137
    %160 = vmatprep.subr.bf16.mxu0 0
    %161 = vmatpush1.bf16.msra.mxu0 %v138
    %162 = vmatprep.subr.bf16.mxu0 0
    %163 = vmatpush1.bf16.msra.mxu0 %v139
    %164 = vmatprep.subr.bf16.mxu0 0
    %165 = vmatpush1.bf16.msra.mxu0 0
    %166 = vmatprep.subr.bf16.mxu0 0
    %167 = vmatpush1.bf16.msra.mxu0 0
    %168 = vmatprep.subr.bf16.mxu0 0
    %169 = vmatpush1.bf16.msra.mxu0 0
    %170 = vmatprep.subr.bf16.mxu0 0
    %171 = vmatpush1.bf16.msra.mxu0 0
    %172 = vmatprep.subr.bf16.mxu0 0
    %173 = vmatpush1.bf16.msra.mxu0 0
    %174 = vmatprep.subr.bf16.mxu0 0
    %175 = vmatpush1.bf16.msra.mxu0 0
    %176 = vmatprep.subr.bf16.mxu0 0
    %177 = vmatpush1.bf16.msra.mxu0 0
    %178 = vmatprep.subr.bf16.mxu0 0
    %179 = vmatpush1.bf16.msra.mxu0 0
    %180 = vmatprep.mubr.bf16.mxu0 0
    %181 = vmatmul.mubr.bf16.gmra.mrb[0].mxu0 %v79
    %v182 = vpop.f32.mrb[0].mxu0
    %v183 = vadd.f32 %v99, %v182
    %v184 = vpop.f32.mrb[0].mxu0
    %v185 = vpop.f32.mrb[0].mxu0
    %v186 = vadd.f32 %v99, %v185
    %v187 = vpop.f32.mrb[0].mxu0
    %188 = vdwg.mxu0
    %189 = vadd.xlane.f32.xlu0 %v183
    %v190 = vpop.xlane.xlu0 %189
    %191 = vadd.xlane.f32.xlu0 %v186
    %v192 = vpop.xlane.xlu0 %191
    %v193 = vmul.f32 %v190, 0.015625
    %v194 = vmul.f32 %v192, 0.015625
    %v195 = vsub.f32 %v183, %v193
    %v196 = vsub.f32 %v186, %v194
    %v197 = vmul.f32 %v195, %v195
    %v198 = vmul.f32 %v196, %v196
    %199 = vadd.xlane.f32.xlu0 %v197
    %v200 = vpop.xlane.xlu0 %199
    %201 = vadd.xlane.f32.xlu0 %v198
    %v202 = vpop.xlane.xlu0 %201
    %v203 = vmul.f32 %v193, %v193
    %v204 = vmul.f32 %v194, %v194
    %v205 = vmul.f32 %v203, 64.0
    %v206 = vmul.f32 %v204, 64.0
    %v207 = vsub.f32 %v200, %v205
    %v208 = vsub.f32 %v202, %v206
    %v209 = vmul.f32 %v207, 0.015625
    %v210 = vmul.f32 %v208, 0.015625
    %v211 = vadd.f32 %v209, 1e-05
    %v212 = vadd.f32 %v210, 1e-05
    %v213 = vrsqrt.pop %v211
    %v214 = vrsqrt.pop %v212
    %v215 = vmul.f32 %v195, %v213
    %v216 = vmul.f32 %v196, %v214
    %v217 = vlaneseq
    %v218 = vshrl.u32 %v217, 7
    %v219 = vsub.s32 1, %v218
    %v220 = vrot.slane %v77, %v219
    %v221 = vmul.f32 %v215, %v220
    %v222 = vmul.f32 %v216, %v220
    %v223 = vlaneseq
    %v224 = vshrl.u32 %v223, 7
    %v225 = vsub.s32 2, %v224
    %v226 = vrot.slane %v77, %v225
    %v227 = vadd.f32 %v221, %v226
    %v228 = vadd.f32 %v222, %v226
    %v229 = vmax.f32 %v227, 0.0
    %v230 = vmax.f32 %v228, 0.0
    %v231 = vpack.c.bf16 %v230, %v229
    %v232 = vld [vmem:[#allocation8] sm:$0xf]
    %v233 = vld [vmem:[#allocation8 + $0x4] sm:$0xf]
    %v234 = vld [vmem:[#allocation8 + $0x8] sm:$0xf]
    %v235 = vld [vmem:[#allocation8 + $0xc] sm:$0xf]
    %v236 = vld [vmem:[#allocation8 + $0x10] sm:$0xf]
    %v237 = vld [vmem:[#allocation8 + $0x14] sm:$0xf]
    %v238 = vld [vmem:[#allocation8 + $0x18] sm:$0xf]
    %v239 = vld [vmem:[#allocation8 + $0x1c] sm:$0xf]
    %v240 = vld [vmem:[#allocation8 + $0x20] sm:$0xf]
    %v241 = vld [vmem:[#allocation8 + $0x24] sm:$0xf]
    %v242 = vld [vmem:[#allocation8 + $0x28] sm:$0xf]
    %v243 = vld [vmem:[#allocation8 + $0x2c] sm:$0xf]
    %v244 = vld [vmem:[#allocation8 + $0x30] sm:$0xf]
    %v245 = vld [vmem:[#allocation8 + $0x34] sm:$0xf]
    %v246 = vld [vmem:[#allocation8 + $0x38] sm:$0xf]
    %v247 = vld [vmem:[#allocation8 + $0x3c] sm:$0xf]
    %v248 = vlaneseq
    %v249 = vshrl.u32 %v248, 7
    %v250 = vsub.s32 0, %v249
    %v251 = vrot.slane %v78, %v250
    %v268 = vunpack.c.l.b16 %v232
    %v269 = vunpack.c.l.b16 %v233
    %v270 = vunpack.c.l.b16 %v234
    %v271 = vunpack.c.l.b16 %v235
    %v272 = vunpack.c.l.b16 %v236
    %v273 = vunpack.c.l.b16 %v237
    %v274 = vunpack.c.l.b16 %v238
    %v275 = vunpack.c.l.b16 %v239
    %v276 = vunpack.c.l.b16 %v240
    %v277 = vunpack.c.l.b16 %v241
    %v278 = vunpack.c.l.b16 %v242
    %v279 = vunpack.c.l.b16 %v243
    %v280 = vunpack.c.l.b16 %v244
    %v281 = vunpack.c.l.b16 %v245
    %v282 = vunpack.c.l.b16 %v246
    %v283 = vunpack.c.l.b16 %v247
    %v284 = vpack.c.b16 %v269, %v268
    %v285 = vpack.c.b16 %v271, %v270
    %v286 = vpack.c.b16 %v273, %v272
    %v287 = vpack.c.b16 %v275, %v274
    %v288 = vpack.c.b16 %v277, %v276
    %v289 = vpack.c.b16 %v279, %v278
    %v290 = vpack.c.b16 %v281, %v280
    %v291 = vpack.c.b16 %v283, %v282
    %300 = vmatprep.subr.bf16.mxu0 0
    %301 = vmatpush1.bf16.msra.mxu0 %v284
    %302 = vmatprep.subr.bf16.mxu0 0
    %303 = vmatpush1.bf16.msra.mxu0 %v285
    %304 = vmatprep.subr.bf16.mxu0 0
    %305 = vmatpush1.bf16.msra.mxu0 %v286
    %306 = vmatprep.subr.bf16.mxu0 0
    %307 = vmatpush1.bf16.msra.mxu0 %v287
    %308 = vmatprep.subr.bf16.mxu0 0
    %309 = vmatpush1.bf16.msra.mxu0 %v288
    %310 = vmatprep.subr.bf16.mxu0 0
    %311 = vmatpush1.bf16.msra.mxu0 %v289
    %312 = vmatprep.subr.bf16.mxu0 0
    %313 = vmatpush1.bf16.msra.mxu0 %v290
    %314 = vmatprep.subr.bf16.mxu0 0
    %315 = vmatpush1.bf16.msra.mxu0 %v291
    %316 = vmatprep.subr.bf16.mxu0 0
    %317 = vmatpush1.bf16.msra.mxu0 0
    %318 = vmatprep.subr.bf16.mxu0 0
    %319 = vmatpush1.bf16.msra.mxu0 0
    %320 = vmatprep.subr.bf16.mxu0 0
    %321 = vmatpush1.bf16.msra.mxu0 0
    %322 = vmatprep.subr.bf16.mxu0 0
    %323 = vmatpush1.bf16.msra.mxu0 0
    %324 = vmatprep.subr.bf16.mxu0 0
    %325 = vmatpush1.bf16.msra.mxu0 0
    %326 = vmatprep.subr.bf16.mxu0 0
    %327 = vmatpush1.bf16.msra.mxu0 0
    %328 = vmatprep.subr.bf16.mxu0 0
    %329 = vmatpush1.bf16.msra.mxu0 0
    %330 = vmatprep.subr.bf16.mxu0 0
    %331 = vmatpush1.bf16.msra.mxu0 0
    %332 = vmatprep.mubr.bf16.mxu0 0
    %333 = vmatmul.mubr.bf16.gmra.mrb[0].mxu0 %v231
    %v334 = vpop.f32.mrb[0].mxu0
    %v335 = vadd.f32 %v251, %v334
    %v336 = vpop.f32.mrb[0].mxu0
    %v337 = vpop.f32.mrb[0].mxu0
    %v338 = vadd.f32 %v251, %v337
    %v339 = vpop.f32.mrb[0].mxu0
    %340 = vdwg.mxu0
    %341 = vadd.xlane.f32.xlu0 %v335
    %v342 = vpop.xlane.xlu0 %341
    %343 = vadd.xlane.f32.xlu0 %v338
    %v344 = vpop.xlane.xlu0 %343
    %v345 = vmul.f32 %v342, 0.03125
    %v346 = vmul.f32 %v344, 0.03125
    %v347 = vsub.f32 %v335, %v345
    %v348 = vsub.f32 %v338, %v346
    %v349 = vmul.f32 %v347, %v347
    %v350 = vmul.f32 %v348, %v348
    %351 = vadd.xlane.f32.xlu0 %v349
    %v352 = vpop.xlane.xlu0 %351
    %353 = vadd.xlane.f32.xlu0 %v350
    %v354 = vpop.xlane.xlu0 %353
    %v355 = vmul.f32 %v345, %v345
    %v356 = vmul.f32 %v346, %v346
    %v357 = vmul.f32 %v355, 96.0
    %v358 = vmul.f32 %v356, 96.0
    %v359 = vsub.f32 %v352, %v357
    %v360 = vsub.f32 %v354, %v358
    %v361 = vmul.f32 %v359, 0.03125
    %v362 = vmul.f32 %v360, 0.03125
    %v363 = vadd.f32 %v361, 1e-05
    %v364 = vadd.f32 %v362, 1e-05
    %v365 = vrsqrt.pop %v363
    %v366 = vrsqrt.pop %v364
    %v367 = vmul.f32 %v347, %v365
    %v368 = vmul.f32 %v348, %v366
    %v369 = vlaneseq
    %v370 = vshrl.u32 %v369, 7
    %v371 = vsub.s32 1, %v370
    %v372 = vrot.slane %v78, %v371
    %v373 = vmul.f32 %v367, %v372
    %v374 = vmul.f32 %v368, %v372
    %v375 = vlaneseq
    %v376 = vshrl.u32 %v375, 7
    %v377 = vsub.s32 2, %v376
    %v378 = vrot.slane %v78, %v377
    %v379 = vadd.f32 %v373, %v378
    %v380 = vadd.f32 %v374, %v378
    %v381 = vadd.f32 %v75, %v379
    %v382 = vadd.f32 %v76, %v380
    %383 = vst [vmem:[#allocation10] sm:$0xff] %v381
    %384 = vst [vmem:[#allocation10 + $0x8] sm:$0xff] %v382
    // Predicated region
    $region38: #{tpu_custom_call.1} parent=1 // pred_check
      _
    $region39: #{tpu_custom_call.1} parent=1 // pred_check_branch
      %386 = sbr.rel (0) target = $region41
    $region40: #{tpu_custom_call.1} parent=1 // pred_region
      %s388 = ssub.s32 256, 256
      %389 = vsyncadd [#allocation4], %s388
      %s390 = sshll.u32 [#allocation10], 4
      %s391 = int_to_ptr.vmem [resolvable:$true] %s390
      %396 = dma.vmem_to_hbm [thread:$0]  %s391, 256, %s5, [#allocation4], 128, 128, 8
    $region41: #{tpu_custom_call.1} parent=1 // pred_fallthru
      _
    // Predicated region
    $region42: #{tpu_custom_call.1} parent=1 // pred_check
      _
    $region43: #{tpu_custom_call.1} parent=1 // pred_check_branch
      %398 = sbr.rel (0) target = $region45
    $region44: #{tpu_custom_call.1} parent=1 // pred_region
      %399 = dma.done [#allocation4], 256
    $region45: #{tpu_custom_call.1} parent=1 // pred_fallthru
      _
    %400 = vsyncpa [#allocation3], 1
    %401 = vsyncpa [#allocation6], 1
    %402 = vsyncpa [#allocation9], 1
    %403 = vsyncpa [#allocation4], 1

// kernel: tpu_custom_call.1
$region0: #{tpu_custom_call.1}
  #allocation0 [shape = 'u32[]', space=smem, size = 0x4, offset = 0x4, fixed_abs, tag = 'smem constant byte address 0x4 - core index']
  #allocation1 [shape = 'u32[144,128]{1,0:T(1,128)}', space=vmem, size = 0x12000, scoped, tag = 'internal scratch']
  %s0 = inlined_call_operand.hbm [shape: f32[16,128], index: 0, kind: input, shape index: {}]
  %s1 = inlined_call_operand.hbm [shape: bf16[128,128], index: 1, kind: input, shape index: {}]
  %s2 = inlined_call_operand.hbm [shape: f32[8,128], index: 2, kind: input, shape index: {}]
  %s3 = inlined_call_operand.hbm [shape: bf16[128,128], index: 3, kind: input, shape index: {}]
  %s4 = inlined_call_operand.vmem [shape: f32[8,128], index: 4, kind: input, shape index: {}]
  %s5 = inlined_call_operand.hbm [shape: f32[16,128], index: 5, kind: output, shape index: {}]
  %s6 = sld [smem:[#allocation0]]
  $region46: #{tpu_custom_call.1} parent=0
    _
  %s8 = ssub.s32 1, %s6
  %s9 = scalar_select 0, %s8, %s6
  $region1: #{tpu_custom_call.1} parent=0
    #allocation2 [shape = 'u8[8192]{0}', space=vmem, size = 0x2000, scoped, tag = 'input window, operand 0, single buffered']
    #allocation3 [shape = 's32[1]{0}', space=sflag, size = 0x4, scoped, tag = 'scoped memory for tpu_custom_call.1']
    #allocation4 [shape = 's32[1]{0}', space=sflag, size = 0x4, scoped, tag = 'scoped memory for tpu_custom_call.1']
    #allocation5 [shape = 'u8[32768]{0}', space=vmem, size = 0x8000, scoped, tag = 'input window, operand 1, single buffered']
    #allocation6 [shape = 's32[1]{0}', space=sflag, size = 0x4, scoped, tag = 'scoped memory for tpu_custom_call.1']
    #allocation7 [shape = 'u8[4096]{0}', space=vmem, size = 0x1000, scoped, tag = 'input window, operand 2, single buffered']
    #allocation8 [shape = 'u8[32768]{0}', space=vmem, size = 0x8000, scoped, tag = 'input window, operand 3, single buffered']
    #allocation9 [shape = 's32[1]{0}', space=sflag, size = 0x4, scoped, tag = 'scoped memory for tpu_custom_call.1']
    #allocation10 [shape = 'u8[8192]{0}', space=vmem, size = 0x2000, scoped, tag = 'output window, operand 0, single buffered']
    %10 = vsyncpa [#allocation3], 0
    %11 = vsyncpa [#allocation6], 0
    %12 = vsyncpa [#allocation9], 0
    %13 = vsyncpa [#allocation4], 0
    // Predicated region
    $region2: #{tpu_custom_call.1} parent=1 // pred_check
      _
    $region3: #{tpu_custom_call.1} parent=1 // pred_check_branch
      %15 = sbr.rel (0) target = $region5
    $region4: #{tpu_custom_call.1} parent=1 // pred_region
      %s17 = ssub.s32 256, 256
      %18 = vsyncadd [#allocation3], %s17
      %s19 = sshll.u32 [#allocation2], 4
      %s20 = int_to_ptr.vmem [resolvable:$true] %s19
      %25 = dma.hbm_to_vmem [thread:$0]  %s0, 256, %s20, [#allocation3], 128, 128, 8
    $region5: #{tpu_custom_call.1} parent=1 // pred_fallthru
      _
    // Predicated region
    $region6: #{tpu_custom_call.1} parent=1 // pred_check
      _
    $region7: #{tpu_custom_call.1} parent=1 // pred_check_branch
      %27 = sbr.rel (0) target = $region9
    $region8: #{tpu_custom_call.1} parent=1 // pred_region
      %s29 = ssub.s32 1024, 1024
      %30 = vsyncadd [#allocation6], %s29
      %s31 = sshll.u32 [#allocation5], 4
      %s32 = int_to_ptr.vmem [resolvable:$true] %s31
      %37 = dma.hbm_to_vmem [thread:$0]  %s1, 1024, %s32, [#allocation6], 64, 64, 4
    $region9: #{tpu_custom_call.1} parent=1 // pred_fallthru
      _
    // Predicated region
    $region10: #{tpu_custom_call.1} parent=1 // pred_check
      _
    $region11: #{tpu_custom_call.1} parent=1 // pred_check_branch
      %39 = sbr.rel (0) target = $region13
    $region12: #{tpu_custom_call.1} parent=1 // pred_region
      %s41 = ssub.s32 128, 128
      %42 = vsyncadd [#allocation6], %s41
      %s44 = sshll.u32 [#allocation7], 4
      %s45 = int_to_ptr.vmem [resolvable:$true] %s44
      %47 = dma.hbm_to_vmem [thread:$0]  %s2, 128, %s45, [#allocation6]
    $region13: #{tpu_custom_call.1} parent=1 // pred_fallthru
      _
    // Predicated region
    $region14: #{tpu_custom_call.1} parent=1 // pred_check
      _
    $region15: #{tpu_custom_call.1} parent=1 // pred_check_branch
      %49 = sbr.rel (0) target = $region17
    $region16: #{tpu_custom_call.1} parent=1 // pred_region
      %s51 = ssub.s32 1024, 1024
      %52 = vsyncadd [#allocation9], %s51
      %s53 = sshll.u32 [#allocation8], 4
      %s54 = int_to_ptr.vmem [resolvable:$true] %s53
      %59 = dma.hbm_to_vmem [thread:$0]  %s3, 1024, %s54, [#allocation9], 64, 64, 4
    $region17: #{tpu_custom_call.1} parent=1 // pred_fallthru
      _
    // Predicated region
    $region18: #{tpu_custom_call.1} parent=1 // pred_check
      _
    $region19: #{tpu_custom_call.1} parent=1 // pred_check_branch
      %61 = sbr.rel (0) target = $region21
    $region20: #{tpu_custom_call.1} parent=1 // pred_region
      _
    $region21: #{tpu_custom_call.1} parent=1 // pred_fallthru
      _
    // Predicated region
    $region22: #{tpu_custom_call.1} parent=1 // pred_check
      _
    $region23: #{tpu_custom_call.1} parent=1 // pred_check_branch
      %63 = sbr.rel (0) target = $region25
    $region24: #{tpu_custom_call.1} parent=1 // pred_region
      %64 = dma.done [#allocation3], 256
    $region25: #{tpu_custom_call.1} parent=1 // pred_fallthru
      _
    // Predicated region
    $region26: #{tpu_custom_call.1} parent=1 // pred_check
      _
    $region27: #{tpu_custom_call.1} parent=1 // pred_check_branch
      %66 = sbr.rel (0) target = $region29
    $region28: #{tpu_custom_call.1} parent=1 // pred_region
      %67 = dma.done [#allocation6], 1024
    $region29: #{tpu_custom_call.1} parent=1 // pred_fallthru
      _
    // Predicated region
    $region30: #{tpu_custom_call.1} parent=1 // pred_check
      _
    $region31: #{tpu_custom_call.1} parent=1 // pred_check_branch
      %69 = sbr.rel (0) target = $region33
    $region32: #{tpu_custom_call.1} parent=1 // pred_region
      %70 = dma.done [#allocation6], 128
    $region33: #{tpu_custom_call.1} parent=1 // pred_fallthru
      _
    // Predicated region
    $region34: #{tpu_custom_call.1} parent=1 // pred_check
      _
    $region35: #{tpu_custom_call.1} parent=1 // pred_check_branch
      %72 = sbr.rel (0) target = $region37
    $region36: #{tpu_custom_call.1} parent=1 // pred_region
      %73 = dma.done [#allocation9], 1024
    $region37: #{tpu_custom_call.1} parent=1 // pred_fallthru
      _
    %v75 = vld [vmem:[#allocation2] sm:$0xff]
    %v76 = vld [vmem:[#allocation2 + $0x8] sm:$0xff]
    %v77 = vld [vmem:[#allocation7] sm:$0xff]
    %v78 = vld [vmem:[%s4] sm:$0xff]
    %v79 = vpack.c.bf16 %v76, %v75
    %v80 = vld [vmem:[#allocation5] sm:$0xf]
    %v81 = vld [vmem:[#allocation5 + $0x4] sm:$0xf]
    %v82 = vld [vmem:[#allocation5 + $0x8] sm:$0xf]
    %v83 = vld [vmem:[#allocation5 + $0xc] sm:$0xf]
    %v84 = vld [vmem:[#allocation5 + $0x10] sm:$0xf]
    %v85 = vld [vmem:[#allocation5 + $0x14] sm:$0xf]
    %v86 = vld [vmem:[#allocation5 + $0x18] sm:$0xf]
    %v87 = vld [vmem:[#allocation5 + $0x1c] sm:$0xf]
    %v88 = vld [vmem:[#allocation5 + $0x20] sm:$0xf]
    %v89 = vld [vmem:[#allocation5 + $0x24] sm:$0xf]
    %v90 = vld [vmem:[#allocation5 + $0x28] sm:$0xf]
    %v91 = vld [vmem:[#allocation5 + $0x2c] sm:$0xf]
    %v92 = vld [vmem:[#allocation5 + $0x30] sm:$0xf]
    %v93 = vld [vmem:[#allocation5 + $0x34] sm:$0xf]
    %v94 = vld [vmem:[#allocation5 + $0x38] sm:$0xf]
    %v95 = vld [vmem:[#allocation5 + $0x3c] sm:$0xf]
    %v96 = vlaneseq
    %v97 = vshrl.u32 %v96, 7
    %v98 = vsub.s32 0, %v97
    %v99 = vrot.slane %v77, %v98
    %v116 = vunpack.c.l.b16 %v80
    %v117 = vunpack.c.l.b16 %v81
    %v118 = vunpack.c.l.b16 %v82
    %v119 = vunpack.c.l.b16 %v83
    %v120 = vunpack.c.l.b16 %v84
    %v121 = vunpack.c.l.b16 %v85
    %v122 = vunpack.c.l.b16 %v86
    %v123 = vunpack.c.l.b16 %v87
    %v124 = vunpack.c.l.b16 %v88
    %v125 = vunpack.c.l.b16 %v89
    %v126 = vunpack.c.l.b16 %v90
    %v127 = vunpack.c.l.b16 %v91
    %v128 = vunpack.c.l.b16 %v92
    %v129 = vunpack.c.l.b16 %v93
    %v130 = vunpack.c.l.b16 %v94
    %v131 = vunpack.c.l.b16 %v95
    %v132 = vpack.c.b16 %v117, %v116
    %v133 = vpack.c.b16 %v119, %v118
    %v134 = vpack.c.b16 %v121, %v120
    %v135 = vpack.c.b16 %v123, %v122
    %v136 = vpack.c.b16 %v125, %v124
    %v137 = vpack.c.b16 %v127, %v126
    %v138 = vpack.c.b16 %v129, %v128
    %v139 = vpack.c.b16 %v131, %v130
    %148 = vmatprep.subr.bf16.mxu0 0
    %149 = vmatpush1.bf16.msra.mxu0 %v132
    %150 = vmatprep.subr.bf16.mxu0 0
    %151 = vmatpush1.bf16.msra.mxu0 %v133
    %152 = vmatprep.subr.bf16.mxu0 0
    %153 = vmatpush1.bf16.msra.mxu0 %v134
    %154 = vmatprep.subr.bf16.mxu0 0
    %155 = vmatpush1.bf16.msra.mxu0 %v135
    %156 = vmatprep.subr.bf16.mxu0 0
    %157 = vmatpush1.bf16.msra.mxu0 %v136
    %158 = vmatprep.subr.bf16.mxu0 0
    %159 = vmatpush1.bf16.msra.mxu0 %v137
    %160 = vmatprep.subr.bf16.mxu0 0
    %161 = vmatpush1.bf16.msra.mxu0 %v138
    %162 = vmatprep.subr.bf16.mxu0 0
    %163 = vmatpush1.bf16.msra.mxu0 %v139
    %164 = vmatprep.subr.bf16.mxu0 0
    %165 = vmatpush1.bf16.msra.mxu0 0
    %166 = vmatprep.subr.bf16.mxu0 0
    %167 = vmatpush1.bf16.msra.mxu0 0
    %168 = vmatprep.subr.bf16.mxu0 0
    %169 = vmatpush1.bf16.msra.mxu0 0
    %170 = vmatprep.subr.bf16.mxu0 0
    %171 = vmatpush1.bf16.msra.mxu0 0
    %172 = vmatprep.subr.bf16.mxu0 0
    %173 = vmatpush1.bf16.msra.mxu0 0
    %174 = vmatprep.subr.bf16.mxu0 0
    %175 = vmatpush1.bf16.msra.mxu0 0
    %176 = vmatprep.subr.bf16.mxu0 0
    %177 = vmatpush1.bf16.msra.mxu0 0
    %178 = vmatprep.subr.bf16.mxu0 0
    %179 = vmatpush1.bf16.msra.mxu0 0
    %180 = vmatprep.mubr.bf16.mxu0 0
    %181 = vmatmul.mubr.bf16.gmra.mrb[0].mxu0 %v79
    %v182 = vpop.f32.mrb[0].mxu0
    %v183 = vadd.f32 %v99, %v182
    %v184 = vpop.f32.mrb[0].mxu0
    %v185 = vpop.f32.mrb[0].mxu0
    %v186 = vadd.f32 %v99, %v185
    %v187 = vpop.f32.mrb[0].mxu0
    %188 = vdwg.mxu0
    %189 = vadd.xlane.f32.xlu0 %v183
    %v190 = vpop.xlane.xlu0 %189
    %191 = vadd.xlane.f32.xlu0 %v186
    %v192 = vpop.xlane.xlu0 %191
    %v193 = vmul.f32 %v190, 0.015625
    %v194 = vmul.f32 %v192, 0.015625
    %v195 = vsub.f32 %v183, %v193
    %v196 = vsub.f32 %v186, %v194
    %v197 = vmul.f32 %v195, %v195
    %v198 = vmul.f32 %v196, %v196
    %199 = vadd.xlane.f32.xlu0 %v197
    %v200 = vpop.xlane.xlu0 %199
    %201 = vadd.xlane.f32.xlu0 %v198
    %v202 = vpop.xlane.xlu0 %201
    %v203 = vmul.f32 %v193, %v193
    %v204 = vmul.f32 %v194, %v194
    %v205 = vmul.f32 %v203, 64.0
    %v206 = vmul.f32 %v204, 64.0
    %v207 = vsub.f32 %v200, %v205
    %v208 = vsub.f32 %v202, %v206
    %v209 = vmul.f32 %v207, 0.015625
    %v210 = vmul.f32 %v208, 0.015625
    %v211 = vadd.f32 %v209, 1e-05
    %v212 = vadd.f32 %v210, 1e-05
    %v213 = vrsqrt.pop %v211
    %v214 = vrsqrt.pop %v212
    %v215 = vmul.f32 %v195, %v213
    %v216 = vmul.f32 %v196, %v214
    %v217 = vlaneseq
    %v218 = vshrl.u32 %v217, 7
    %v219 = vsub.s32 1, %v218
    %v220 = vrot.slane %v77, %v219
    %v221 = vmul.f32 %v215, %v220
    %v222 = vmul.f32 %v216, %v220
    %v223 = vlaneseq
    %v224 = vshrl.u32 %v223, 7
    %v225 = vsub.s32 2, %v224
    %v226 = vrot.slane %v77, %v225
    %v227 = vadd.f32 %v221, %v226
    %v228 = vadd.f32 %v222, %v226
    %v229 = vmax.f32 %v227, 0.0
    %v230 = vmax.f32 %v228, 0.0
    %v231 = vpack.c.bf16 %v230, %v229
    %v232 = vld [vmem:[#allocation8] sm:$0xf]
    %v233 = vld [vmem:[#allocation8 + $0x4] sm:$0xf]
    %v234 = vld [vmem:[#allocation8 + $0x8] sm:$0xf]
    %v235 = vld [vmem:[#allocation8 + $0xc] sm:$0xf]
    %v236 = vld [vmem:[#allocation8 + $0x10] sm:$0xf]
    %v237 = vld [vmem:[#allocation8 + $0x14] sm:$0xf]
    %v238 = vld [vmem:[#allocation8 + $0x18] sm:$0xf]
    %v239 = vld [vmem:[#allocation8 + $0x1c] sm:$0xf]
    %v240 = vld [vmem:[#allocation8 + $0x20] sm:$0xf]
    %v241 = vld [vmem:[#allocation8 + $0x24] sm:$0xf]
    %v242 = vld [vmem:[#allocation8 + $0x28] sm:$0xf]
    %v243 = vld [vmem:[#allocation8 + $0x2c] sm:$0xf]
    %v244 = vld [vmem:[#allocation8 + $0x30] sm:$0xf]
    %v245 = vld [vmem:[#allocation8 + $0x34] sm:$0xf]
    %v246 = vld [vmem:[#allocation8 + $0x38] sm:$0xf]
    %v247 = vld [vmem:[#allocation8 + $0x3c] sm:$0xf]
    %v248 = vlaneseq
    %v249 = vshrl.u32 %v248, 7
    %v250 = vsub.s32 0, %v249
    %v251 = vrot.slane %v78, %v250
    %v268 = vunpack.c.l.b16 %v232
    %v269 = vunpack.c.l.b16 %v233
    %v270 = vunpack.c.l.b16 %v234
    %v271 = vunpack.c.l.b16 %v235
    %v272 = vunpack.c.l.b16 %v236
    %v273 = vunpack.c.l.b16 %v237
    %v274 = vunpack.c.l.b16 %v238
    %v275 = vunpack.c.l.b16 %v239
    %v276 = vunpack.c.l.b16 %v240
    %v277 = vunpack.c.l.b16 %v241
    %v278 = vunpack.c.l.b16 %v242
    %v279 = vunpack.c.l.b16 %v243
    %v280 = vunpack.c.l.b16 %v244
    %v281 = vunpack.c.l.b16 %v245
    %v282 = vunpack.c.l.b16 %v246
    %v283 = vunpack.c.l.b16 %v247
    %v284 = vpack.c.b16 %v269, %v268
    %v285 = vpack.c.b16 %v271, %v270
    %v286 = vpack.c.b16 %v273, %v272
    %v287 = vpack.c.b16 %v275, %v274
    %v288 = vpack.c.b16 %v277, %v276
    %v289 = vpack.c.b16 %v279, %v278
    %v290 = vpack.c.b16 %v281, %v280
    %v291 = vpack.c.b16 %v283, %v282
    %300 = vmatprep.subr.bf16.mxu0 0
    %301 = vmatpush1.bf16.msra.mxu0 %v284
    %302 = vmatprep.subr.bf16.mxu0 0
    %303 = vmatpush1.bf16.msra.mxu0 %v285
    %304 = vmatprep.subr.bf16.mxu0 0
    %305 = vmatpush1.bf16.msra.mxu0 %v286
    %306 = vmatprep.subr.bf16.mxu0 0
    %307 = vmatpush1.bf16.msra.mxu0 %v287
    %308 = vmatprep.subr.bf16.mxu0 0
    %309 = vmatpush1.bf16.msra.mxu0 %v288
    %310 = vmatprep.subr.bf16.mxu0 0
    %311 = vmatpush1.bf16.msra.mxu0 %v289
    %312 = vmatprep.subr.bf16.mxu0 0
    %313 = vmatpush1.bf16.msra.mxu0 %v290
    %314 = vmatprep.subr.bf16.mxu0 0
    %315 = vmatpush1.bf16.msra.mxu0 %v291
    %316 = vmatprep.subr.bf16.mxu0 0
    %317 = vmatpush1.bf16.msra.mxu0 0
    %318 = vmatprep.subr.bf16.mxu0 0
    %319 = vmatpush1.bf16.msra.mxu0 0
    %320 = vmatprep.subr.bf16.mxu0 0
    %321 = vmatpush1.bf16.msra.mxu0 0
    %322 = vmatprep.subr.bf16.mxu0 0
    %323 = vmatpush1.bf16.msra.mxu0 0
    %324 = vmatprep.subr.bf16.mxu0 0
    %325 = vmatpush1.bf16.msra.mxu0 0
    %326 = vmatprep.subr.bf16.mxu0 0
    %327 = vmatpush1.bf16.msra.mxu0 0
    %328 = vmatprep.subr.bf16.mxu0 0
    %329 = vmatpush1.bf16.msra.mxu0 0
    %330 = vmatprep.subr.bf16.mxu0 0
    %331 = vmatpush1.bf16.msra.mxu0 0
    %332 = vmatprep.mubr.bf16.mxu0 0
    %333 = vmatmul.mubr.bf16.gmra.mrb[0].mxu0 %v231
    %v334 = vpop.f32.mrb[0].mxu0
    %v335 = vadd.f32 %v251, %v334
    %v336 = vpop.f32.mrb[0].mxu0
    %v337 = vpop.f32.mrb[0].mxu0
    %v338 = vadd.f32 %v251, %v337
    %v339 = vpop.f32.mrb[0].mxu0
    %340 = vdwg.mxu0
    %341 = vadd.xlane.f32.xlu0 %v335
    %v342 = vpop.xlane.xlu0 %341
    %343 = vadd.xlane.f32.xlu0 %v338
    %v344 = vpop.xlane.xlu0 %343
    %v345 = vmul.f32 %v342, 0.03125
    %v346 = vmul.f32 %v344, 0.03125
    %v347 = vsub.f32 %v335, %v345
    %v348 = vsub.f32 %v338, %v346
    %v349 = vmul.f32 %v347, %v347
    %v350 = vmul.f32 %v348, %v348
    %351 = vadd.xlane.f32.xlu0 %v349
    %v352 = vpop.xlane.xlu0 %351
    %353 = vadd.xlane.f32.xlu0 %v350
    %v354 = vpop.xlane.xlu0 %353
    %v355 = vmul.f32 %v345, %v345
    %v356 = vmul.f32 %v346, %v346
    %v357 = vmul.f32 %v355, 96.0
    %v358 = vmul.f32 %v356, 96.0
    %v359 = vsub.f32 %v352, %v357
    %v360 = vsub.f32 %v354, %v358
    %v361 = vmul.f32 %v359, 0.03125
    %v362 = vmul.f32 %v360, 0.03125
    %v363 = vadd.f32 %v361, 1e-05
    %v364 = vadd.f32 %v362, 1e-05
    %v365 = vrsqrt.pop %v363
    %v366 = vrsqrt.pop %v364
    %v367 = vmul.f32 %v347, %v365
    %v368 = vmul.f32 %v348, %v366
    %v369 = vlaneseq
    %v370 = vshrl.u32 %v369, 7
    %v371 = vsub.s32 1, %v370
    %v372 = vrot.slane %v78, %v371
    %v373 = vmul.f32 %v367, %v372
    %v374 = vmul.f32 %v368, %v372
    %v375 = vlaneseq
    %v376 = vshrl.u32 %v375, 7
    %v377 = vsub.s32 2, %v376
    %v378 = vrot.slane %v78, %v377
    %v379 = vadd.f32 %v373, %v378
    %v380 = vadd.f32 %v374, %v378
    %v381 = vadd.f32 %v75, %v379
    %v382 = vadd.f32 %v76, %v380
    %383 = vst [vmem:[#allocation10] sm:$0xff] %v381
    %384 = vst [vmem:[#allocation10 + $0x8] sm:$0xff] %v382
    // Predicated region
    $region38: #{tpu_custom_call.1} parent=1 // pred_check
      _
    $region39: #{tpu_custom_call.1} parent=1 // pred_check_branch
      %386 = sbr.rel (0) target = $region41
    $region40: #{tpu_custom_call.1} parent=1 // pred_region
      %s388 = ssub.s32 256, 256
      %389 = vsyncadd [#allocation4], %s388
      %s390 = sshll.u32 [#allocation10], 4
      %s391 = int_to_ptr.vmem [resolvable:$true] %s390
      %396 = dma.vmem_to_hbm [thread:$0]  %s391, 256, %s5, [#allocation4], 128, 128, 8
    $region41: #{tpu_custom_call.1} parent=1 // pred_fallthru
      _
    // Predicated region
    $region42: #{tpu_custom_call.1} parent=1 // pred_check
      _
    $region43: #{tpu_custom_call.1} parent=1 // pred_check_branch
      %398 = sbr.rel (0) target = $region45
    $region44: #{tpu_custom_call.1} parent=1 // pred_region
      %399 = dma.done [#allocation4], 256
    $region45: #{tpu_custom_call.1} parent=1 // pred_fallthru
      _
    %400 = vsyncpa [#allocation3], 1
    %401 = vsyncpa [#allocation6], 1
    %402 = vsyncpa [#allocation9], 1
    %403 = vsyncpa [#allocation4], 1

</llo_original>
